<compile_context>
chip_gen: v7x
topology: tpu7x:2x2x1
jax: 0.10.0
libtpu: 0.0.40
codegen_flags: <defaults>
</compile_context>

<pallas_src>
import jax
import jax.numpy as jnp
from jax.experimental import pallas as pl
from jax.experimental.pallas import tpu as pltpu


def _stable_softplus(x):
    # softplus(x) = max(x, 0) + log1p(exp(-|x|))  -- no overflow for large x.
    return jnp.maximum(x, 0.0) + jnp.log1p(jnp.exp(-jnp.abs(x)))


def _nig_kernel(x_ref, w_ref, b_ref, out_ref):
    """out slab layout: [mu | v | alpha | beta], each block D wide."""
    D = out_ref.shape[-1] // 4
    # (TM, H) @ (H, 3*D) on the MXU, f32 accumulation.
    acc = jnp.dot(x_ref[...], w_ref[...], preferred_element_type=jnp.float32)
    acc = acc + b_ref[...]                       # bias kept in f32

    mu = acc[:, 0:D]
    v = _stable_softplus(acc[:, D:2 * D])        # evidence(log_v)
    beta = _stable_softplus(acc[:, 2 * D:3 * D])  # evidence(log_beta)

    out_ref[:, 0:D] = mu.astype(out_ref.dtype)
    out_ref[:, D:2 * D] = v.astype(out_ref.dtype)
    out_ref[:, 2 * D:3 * D] = (v + 1.0).astype(out_ref.dtype)   # alpha = v + 1
    out_ref[:, 3 * D:4 * D] = beta.astype(out_ref.dtype)


def prepare_nig_params(weight, bias, dim_out, compute_dtype=jnp.float32):
    """One-time regroup of torch nn.Linear params; call once at load time.

    torch: linear(x).view(B, D, 4) => output column d*4 + k is component k of dim d.
    We keep only the components the forward uses (mu=0, log_v=1, log_beta=3) and
    lay the weight out as (H, 3*D) with contiguous component blocks.
    """
    D = dim_out
    H = weight.shape[1]
    w = weight.reshape(D, 4, H)                                   # [d, k, :] = weight[d*4+k]
    w_sel = jnp.stack([w[:, 0, :], w[:, 1, :], w[:, 3, :]], 0)    # (3, D, H)
    w_k = w_sel.reshape(3 * D, H).T.astype(compute_dtype)         # (H, 3*D)
    b = bias.reshape(D, 4)
    b_k = jnp.stack([b[:, 0], b[:, 1], b[:, 3]], 0).reshape(1, 3 * D)
    return w_k, b_k.astype(jnp.float32)


def simple_dense_normal_gamma_prepared(x, w_k, b_k, dim_out, *, tile_m=512):
    """Forward pass given pre-regrouped params (w_k: (H, 3D), b_k: (1, 3D))."""
    B, H = x.shape
    D = dim_out

    if B <= tile_m:
        TM, B_pad = B, B                 # single block, full batch extent
    else:
        TM = tile_m                       # multiple of 8 (f32 sublane)
        B_pad = ((B + TM - 1) // TM) * TM

    x_in = x if B_pad == B else jnp.pad(x, ((0, B_pad - B), (0, 0)))
    x_in = x_in.astype(w_k.dtype)         # match MXU compute dtype (f32 or bf16)

    slab = pl.pallas_call(
        _nig_kernel,
        out_shape=jax.ShapeDtypeStruct((B_pad, 4 * D), jnp.float32),
        grid=(B_pad // TM,),
        in_specs=[
            pl.BlockSpec((TM, H), lambda i: (i, 0)),       # x tile, double-buffered
            pl.BlockSpec((H, 3 * D), lambda i: (0, 0)),    # weight resident in VMEM
            pl.BlockSpec((1, 3 * D), lambda i: (0, 0)),    # bias resident in VMEM
        ],
        out_specs=pl.BlockSpec((TM, 4 * D), lambda i: (i, 0)),  # single fused slab
        compiler_params=pltpu.CompilerParams(
            dimension_semantics=("parallel",),             # v7x: shard grid over 2 TCs
        ),
    )(x_in, w_k, b_k)

    slab = slab[:B]
    mu = slab[:, 0:D]
    v = slab[:, D:2 * D]
    alpha = slab[:, 2 * D:3 * D]
    beta = slab[:, 3 * D:4 * D]
    return mu, v, alpha, beta


def simple_dense_normal_gamma(x, weight, bias, dim_out, *, compute_dtype=jnp.float32,
                              tile_m=512):
    """Convenience wrapper: regroup params then run the Pallas kernel."""
    w_k, b_k = prepare_nig_params(weight, bias, dim_out, compute_dtype)
    return simple_dense_normal_gamma_prepared(x, w_k, b_k, dim_out, tile_m=tile_m)


def _reference(x, weight, bias, dim_out):
    """Plain-JAX reference mirroring the PyTorch module exactly."""
    out = x @ weight.T + bias
    out = out.reshape(x.shape[0], -1, 4)
    mu = out[..., 0]
    log_v = out[..., 1]
    log_beta = out[..., 3]
    v = jnp.log(1.0 + jnp.exp(log_v))
    alpha = v + 1.0
    beta = jnp.log(1.0 + jnp.exp(log_beta))
    return mu, v, alpha, beta


if __name__ == "__main__":
    hidden_dim = 32
    dim_out = 8
    batch = 2

    key = jax.random.PRNGKey(0)
    kx, kw, kb, kx2 = jax.random.split(key, 4)

    # torch nn.Linear default init: U(-1/sqrt(H), 1/sqrt(H)).
    bound = 1.0 / jnp.sqrt(hidden_dim)
    weight = jax.random.uniform(kw, (4 * dim_out, hidden_dim), jnp.float32, -bound, bound)
    bias = jax.random.uniform(kb, (4 * dim_out,), jnp.float32, -bound, bound)
    x = jax.random.normal(kx, (batch, hidden_dim), jnp.float32)

    # --- small-shape f32 check (exact vs reference) ---
    mu, v, alpha, beta = simple_dense_normal_gamma(x, weight, bias, dim_out)
    jax.block_until_ready((mu, v, alpha, beta))
    mu_r, v_r, alpha_r, beta_r = _reference(x, weight, bias, dim_out)
    for got, ref in ((mu, mu_r), (v, v_r), (alpha, alpha_r), (beta, beta_r)):
        assert got.shape == (batch, dim_out)
        assert jnp.allclose(got, ref, atol=1e-5, rtol=1e-5)

    # --- gridded / padded batch path (exercises tile_m + megacore semantics) ---
    big_b = 1040                      # > tile_m=512, not a multiple -> padding path
    x_big = jax.random.normal(kx2, (big_b, hidden_dim), jnp.float32)
    outs_big = simple_dense_normal_gamma(x_big, weight, bias, dim_out)
    jax.block_until_ready(outs_big)
    refs_big = _reference(x_big, weight, bias, dim_out)
    for got, ref in zip(outs_big, refs_big):
        assert got.shape == (big_b, dim_out)
        assert jnp.allclose(got, ref, atol=1e-5, rtol=1e-5)

    # --- bf16 MXU-input path (f32 accumulation), loose tolerance ---
    outs_bf16 = simple_dense_normal_gamma(x, weight, bias, dim_out,
                                          compute_dtype=jnp.bfloat16)
    jax.block_until_ready(outs_bf16)
    for got, ref in zip(outs_bf16, (mu_r, v_r, alpha_r, beta_r)):
        assert jnp.all(jnp.isfinite(got))
        assert jnp.allclose(got, ref, atol=1e-1, rtol=1e-1)

    print("KERNEL_OK")
</pallas_src>

<mosaic_0001>
module attributes {stable_mosaic.version = 11 : i64} {
  func.func @_nig_kernel(%arg0: i32, %arg1: memref<2x32xf32, #tpu.memory_space<vmem>>, %arg2: memref<32x24xf32, #tpu.memory_space<vmem>>, %arg3: memref<1x24xf32, #tpu.memory_space<vmem>>, %arg4: memref<2x32xf32, #tpu.memory_space<vmem>>) attributes {dimension_semantics = [#tpu.dimension_semantics<parallel>], iteration_bounds = array<i64: 1>, scalar_prefetch = 0 : i64, scratch_operands = 0 : i64, tpu.core_type = #tpu.core_type<tc>, window_params = [{transform_indices = @transform_0, window_bounds = array<i64: 2, 32>}, {pipeline_mode = #tpu.pipeline_mode<synchronous>, transform_indices = @transform_1, window_bounds = array<i64: 32, 24>}, {pipeline_mode = #tpu.pipeline_mode<synchronous>, transform_indices = @transform_2, window_bounds = array<i64: 1, 24>}, {transform_indices = @transform_3, window_bounds = array<i64: 2, 32>}]} {
    %c0 = arith.constant 0 : index
    %c0_0 = arith.constant 0 : index
    %0 = vector.load %arg1[%c0, %c0_0] : memref<2x32xf32, #tpu.memory_space<vmem>>, vector<2x32xf32>
    %c0_1 = arith.constant 0 : index
    %c0_2 = arith.constant 0 : index
    %1 = vector.load %arg2[%c0_1, %c0_2] : memref<32x24xf32, #tpu.memory_space<vmem>>, vector<32x24xf32>
    %cst = arith.constant dense<0.000000e+00> : vector<2x24xf32>
    %2 = tpu.matmul %0, %1, %cst {dimension_numbers = #tpu.dot_dimension_numbers<[1], [0], [0], [1], [0, 0, 1, 1], [], []>} : vector<2x32xf32>, vector<32x24xf32>, vector<2x24xf32> -> vector<2x24xf32>
    %c0_3 = arith.constant 0 : index
    %c0_4 = arith.constant 0 : index
    %3 = vector.load %arg3[%c0_3, %c0_4] : memref<1x24xf32, #tpu.memory_space<vmem>>, vector<1x24xf32>
    %4 = vector.broadcast %3 : vector<1x24xf32> to vector<2x24xf32>
    %5 = arith.addf %2, %4 : vector<2x24xf32>
    %6 = vector.extract_strided_slice %5 {offsets = [0, 0], sizes = [2, 8], strides = [1, 1]} : vector<2x24xf32> to vector<2x8xf32>
    %7 = vector.extract_strided_slice %5 {offsets = [0, 8], sizes = [2, 8], strides = [1, 1]} : vector<2x24xf32> to vector<2x8xf32>
    %cst_5 = arith.constant 0.000000e+00 : f32
    %8 = vector.broadcast %cst_5 : f32 to vector<2x8xf32>
    %9 = arith.maximumf %7, %8 : vector<2x8xf32>
    %10 = math.absf %7 : vector<2x8xf32>
    %cst_6 = arith.constant 0.000000e+00 : f32
    %11 = vector.broadcast %cst_6 : f32 to vector<2x8xf32>
    %12 = arith.subf %11, %10 : vector<2x8xf32>
    %13 = math.exp %12 : vector<2x8xf32>
    %14 = math.log1p %13 : vector<2x8xf32>
    %15 = arith.addf %9, %14 : vector<2x8xf32>
    %16 = vector.extract_strided_slice %5 {offsets = [0, 16], sizes = [2, 8], strides = [1, 1]} : vector<2x24xf32> to vector<2x8xf32>
    %cst_7 = arith.constant 0.000000e+00 : f32
    %17 = vector.broadcast %cst_7 : f32 to vector<2x8xf32>
    %18 = arith.maximumf %16, %17 : vector<2x8xf32>
    %19 = math.absf %16 : vector<2x8xf32>
    %cst_8 = arith.constant 0.000000e+00 : f32
    %20 = vector.broadcast %cst_8 : f32 to vector<2x8xf32>
    %21 = arith.subf %20, %19 : vector<2x8xf32>
    %22 = math.exp %21 : vector<2x8xf32>
    %23 = math.log1p %22 : vector<2x8xf32>
    %24 = arith.addf %18, %23 : vector<2x8xf32>
    %c0_9 = arith.constant 0 : index
    %c0_10 = arith.constant 0 : index
    %25 = vector.load %arg4[%c0_9, %c0_10] : memref<2x32xf32, #tpu.memory_space<vmem>>, vector<2x8xf32>
    tpu.vector_store %arg4[%c0_9, %c0_10], %6 {strides = array<i32>} : memref<2x32xf32, #tpu.memory_space<vmem>>, vector<2x8xf32>,
    %c0_11 = arith.constant 0 : index
    %c8 = arith.constant 8 : index
    %26 = vector.load %arg4[%c0_11, %c8] : memref<2x32xf32, #tpu.memory_space<vmem>>, vector<2x8xf32>
    tpu.vector_store %arg4[%c0_11, %c8], %15 {strides = array<i32>} : memref<2x32xf32, #tpu.memory_space<vmem>>, vector<2x8xf32>,
    %cst_12 = arith.constant 1.000000e+00 : f32
    %27 = vector.broadcast %cst_12 : f32 to vector<2x8xf32>
    %28 = arith.addf %15, %27 : vector<2x8xf32>
    %c0_13 = arith.constant 0 : index
    %c16 = arith.constant 16 : index
    %29 = vector.load %arg4[%c0_13, %c16] : memref<2x32xf32, #tpu.memory_space<vmem>>, vector<2x8xf32>
    tpu.vector_store %arg4[%c0_13, %c16], %28 {strides = array<i32>} : memref<2x32xf32, #tpu.memory_space<vmem>>, vector<2x8xf32>,
    %c0_14 = arith.constant 0 : index
    %c24 = arith.constant 24 : index
    %30 = vector.load %arg4[%c0_14, %c24] : memref<2x32xf32, #tpu.memory_space<vmem>>, vector<2x8xf32>
    tpu.vector_store %arg4[%c0_14, %c24], %24 {strides = array<i32>} : memref<2x32xf32, #tpu.memory_space<vmem>>, vector<2x8xf32>,
    return
  }
  func.func @transform_0(%arg0: i32) -> (i32, i32) {
    %c0_i32 = arith.constant 0 : i32
    %c0_i32_0 = arith.constant 0 : i32
    return %arg0, %c0_i32 : i32, i32
  }
  func.func @transform_1(%arg0: i32) -> (i32, i32) {
    %c0_i32 = arith.constant 0 : i32
    %c0_i32_0 = arith.constant 0 : i32
    %c0_i32_1 = arith.constant 0 : i32
    return %c0_i32, %c0_i32_0 : i32, i32
  }
  func.func @transform_2(%arg0: i32) -> (i32, i32) {
    %c0_i32 = arith.constant 0 : i32
    %c0_i32_0 = arith.constant 0 : i32
    %c0_i32_1 = arith.constant 0 : i32
    return %c0_i32, %c0_i32_0 : i32, i32
  }
  func.func @transform_3(%arg0: i32) -> (i32, i32) {
    %c0_i32 = arith.constant 0 : i32
    %c0_i32_0 = arith.constant 0 : i32
    return %arg0, %c0_i32 : i32, i32
  }
}

</mosaic_0001>

<llo_original>
// kernel: tpu_custom_call.1
$region0: #{tpu_custom_call.1}
  #allocation0 [shape = 'u32[]', space=smem, size = 0x4, offset = 0x4, fixed_abs, tag = 'smem constant byte address 0x4 - core index']
  #allocation1 [shape = 'u32[144,128]{1,0:T(1,128)}', space=vmem, size = 0x12000, scoped, tag = 'internal scratch']
  %s0 = inlined_call_operand.vmem [shape: f32[2,32], index: 0, kind: input, shape index: {}]
  %s1 = inlined_call_operand.vmem [shape: f32[32,24], index: 1, kind: input, shape index: {}]
  %s2 = inlined_call_operand.vmem [shape: f32[1,24], index: 2, kind: input, shape index: {}]
  %s3 = inlined_call_operand.hbm [shape: f32[2,32], index: 3, kind: output, shape index: {}]
  %s4 = sld [smem:[#allocation0]]
  $region22: #{tpu_custom_call.1} parent=0
    _
  %s6 = ssub.s32 1, %s4
  %s7 = scalar_select 0, %s6, %s4
  $region1: #{tpu_custom_call.1} parent=0
    #allocation2 [shape = 'u8[1024]{0}', space=vmem, size = 0x400, scoped, tag = 'output window, operand 0, single buffered']
    #allocation3 [shape = 's32[1]{0}', space=sflag, size = 0x4, scoped, tag = 'scoped memory for tpu_custom_call.1']
    %8 = vsyncpa [#allocation3], 0
    // Predicated region
    $region2: #{tpu_custom_call.1} parent=1 // pred_check
      _
    $region3: #{tpu_custom_call.1} parent=1 // pred_check_branch
      %10 = sbr.rel (0) target = $region5
    $region4: #{tpu_custom_call.1} parent=1 // pred_region
      _
    $region5: #{tpu_custom_call.1} parent=1 // pred_fallthru
      _
    // Predicated region
    $region6: #{tpu_custom_call.1} parent=1 // pred_check
      _
    $region7: #{tpu_custom_call.1} parent=1 // pred_check_branch
      %12 = sbr.rel (0) target = $region9
    $region8: #{tpu_custom_call.1} parent=1 // pred_region
      _
    $region9: #{tpu_custom_call.1} parent=1 // pred_fallthru
      _
    // Predicated region
    $region10: #{tpu_custom_call.1} parent=1 // pred_check
      _
    $region11: #{tpu_custom_call.1} parent=1 // pred_check_branch
      %14 = sbr.rel (0) target = $region13
    $region12: #{tpu_custom_call.1} parent=1 // pred_region
      _
    $region13: #{tpu_custom_call.1} parent=1 // pred_fallthru
      _
    %v15 = vld [vmem:[%s0] sm:$0x3]
    %v16 = vld [vmem:[%s1] sm:$0xff]
    %v17 = vld [vmem:[%s1 + $0x8] sm:$0xff]
    %v18 = vld [vmem:[%s1 + $0x10] sm:$0xff]
    %v19 = vld [vmem:[%s1 + $0x18] sm:$0xff]
    %v20 = vld [vmem:[%s2] sm:$0x1]
    %v22 = vlaneseq
    %v23 = vshrl.u32 %v22, 7
    %v24 = vsub.s32 0, %v23
    %v25 = vrot.slane %v20, %v24
    %vm27 = vcmask 261120
    %v29 = vsel %vm27, %v15, 0
    %31 = vmatprep.subr.mxu0 0.0
    %32 = vmatpush1.msra.mxu0 %v16
    %33 = vmatprep.subr.mxu0 0.0
    %34 = vmatpush1.msra.mxu0 %v17
    %35 = vmatprep.subr.mxu0 0.0
    %36 = vmatpush1.msra.mxu0 %v18
    %37 = vmatprep.subr.mxu0 0.0
    %38 = vmatpush1.msra.mxu0 %v19
    %39 = vmatprep.subr.mxu0 0.0
    %40 = vmatpush1.msra.mxu0 0.0
    %41 = vmatprep.subr.mxu0 0.0
    %42 = vmatpush1.msra.mxu0 0.0
    %43 = vmatprep.subr.mxu0 0.0
    %44 = vmatpush1.msra.mxu0 0.0
    %45 = vmatprep.subr.mxu0 0.0
    %46 = vmatpush1.msra.mxu0 0.0
    %47 = vmatprep.subr.mxu0 0.0
    %48 = vmatpush1.msra.mxu0 0.0
    %49 = vmatprep.subr.mxu0 0.0
    %50 = vmatpush1.msra.mxu0 0.0
    %51 = vmatprep.subr.mxu0 0.0
    %52 = vmatpush1.msra.mxu0 0.0
    %53 = vmatprep.subr.mxu0 0.0
    %54 = vmatpush1.msra.mxu0 0.0
    %55 = vmatprep.subr.mxu0 0.0
    %56 = vmatpush1.msra.mxu0 0.0
    %57 = vmatprep.subr.mxu0 0.0
    %58 = vmatpush1.msra.mxu0 0.0
    %59 = vmatprep.subr.mxu0 0.0
    %60 = vmatpush1.msra.mxu0 0.0
    %61 = vmatprep.subr.mxu0 0.0
    %62 = vmatpush1.msra.mxu0 0.0
    %63 = vmatprep.subr.mxu0 0.0
    %64 = vmatpush1.msra.mxu0 0.0
    %65 = vmatprep.subr.mxu0 0.0
    %66 = vmatpush1.msra.mxu0 0.0
    %67 = vmatprep.subr.mxu0 0.0
    %68 = vmatpush1.msra.mxu0 0.0
    %69 = vmatprep.subr.mxu0 0.0
    %70 = vmatpush1.msra.mxu0 0.0
    %71 = vmatprep.subr.mxu0 0.0
    %72 = vmatpush1.msra.mxu0 0.0
    %73 = vmatprep.subr.mxu0 0.0
    %74 = vmatpush1.msra.mxu0 0.0
    %75 = vmatprep.subr.mxu0 0.0
    %76 = vmatpush1.msra.mxu0 0.0
    %77 = vmatprep.subr.mxu0 0.0
    %78 = vmatpush1.msra.mxu0 0.0
    %79 = vmatprep.subr.mxu0 0.0
    %80 = vmatpush1.msra.mxu0 0.0
    %81 = vmatprep.subr.mxu0 0.0
    %82 = vmatpush1.msra.mxu0 0.0
    %83 = vmatprep.subr.mxu0 0.0
    %84 = vmatpush1.msra.mxu0 0.0
    %85 = vmatprep.subr.mxu0 0.0
    %86 = vmatpush1.msra.mxu0 0.0
    %87 = vmatprep.subr.mxu0 0.0
    %88 = vmatpush1.msra.mxu0 0.0
    %89 = vmatprep.subr.mxu0 0.0
    %90 = vmatpush1.msra.mxu0 0.0
    %91 = vmatprep.subr.mxu0 0.0
    %92 = vmatpush1.msra.mxu0 0.0
    %93 = vmatprep.subr.mxu0 0.0
    %94 = vmatpush1.msra.mxu0 0.0
    %95 = vmatprep.mubr.f32.mxu0 0.0
    %96 = vmatmul.mubr.f32.gmra.mrb[0].mxu0 %v29
    %v97 = vpop.f32.mrb[0].mxu0
    %v98 = vadd.f32 %v25, %v97
    %v99 = vpop.f32.mrb[0].mxu0
    %100 = vdwg.mxu0
    %v101 = vmax.f32 %v98, 0.0
    %v102 = vand.u32 2147483647, %v98
    %v103 = vsub.f32 0.0, %v102
    %v104 = vmul.f32 %v103, 1.442695
    %v105 = vpow.pop %v104
    %v106 = vadd.f32 %v105, 1.0
    %v107 = vlog2.pop %v106
    %v108 = vmul.f32 %v107, 0.6931472
    %v109 = vmul.f32 -0.5, %v105
    %v110 = vadd.f32 %v109, 1.0
    %v111 = vmul.f32 %v110, %v105
    %v112 = vand.u32 2147483647, %v105
    %vm113 = vcmp.lt.f32.partialorder %v112, 0.0004427343
    %v114 = vsel %vm113, %v111, %v108
    %v115 = vadd.f32 %v101, %v114
    %vm116 = vcmask 58368
    %117 = vst.msk [vmem:[#allocation2] sm:$0x3] %vm116, %v98
    %vm118 = vcmask 123968
    %119 = vst.msk [vmem:[#allocation2] sm:$0x3] %vm118, %v115
    %v120 = vadd.f32 %v115, 1.0
    %122 = vrot.lane.b32.xlu0 %v120, 8
    %v123 = vpop.permute.xlu0 %122
    %vm125 = vcmask 189568
    %126 = vst.msk [vmem:[#allocation2] sm:$0x3] %vm125, %v123
    %128 = vrot.lane.b32.xlu0 %v115, 8
    %v129 = vpop.permute.xlu0 %128
    %vm131 = vcmask 255168
    %132 = vst.msk [vmem:[#allocation2] sm:$0x3] %vm131, %v129
    // Predicated region
    $region14: #{tpu_custom_call.1} parent=1 // pred_check
      _
    $region15: #{tpu_custom_call.1} parent=1 // pred_check_branch
      %134 = sbr.rel (0) target = $region17
    $region16: #{tpu_custom_call.1} parent=1 // pred_region
      %s136 = ssub.s32 32, 32
      %137 = vsyncadd [#allocation3], %s136
      %s139 = sshll.u32 [#allocation2], 4
      %s140 = int_to_ptr.vmem [resolvable:$true] %s139
      %142 = dma.vmem_to_hbm [thread:$0]  %s140, 32, %s3, [#allocation3]
    $region17: #{tpu_custom_call.1} parent=1 // pred_fallthru
      _
    // Predicated region
    $region18: #{tpu_custom_call.1} parent=1 // pred_check
      _
    $region19: #{tpu_custom_call.1} parent=1 // pred_check_branch
      %144 = sbr.rel (0) target = $region21
    $region20: #{tpu_custom_call.1} parent=1 // pred_region
      %145 = dma.done [#allocation3], 32
    $region21: #{tpu_custom_call.1} parent=1 // pred_fallthru
      _
    %146 = vsyncpa [#allocation3], 1

</llo_original>
